<compile_context>
chip_gen: v7x
topology: tpu7x:2x2x1
jax: 0.10.0
libtpu: 0.0.40
codegen_flags: <defaults>
</compile_context>

<pallas_src>
import jax
import jax.numpy as jnp
from jax import lax
from jax.experimental import pallas as pl
from jax.experimental.pallas import tpu as pltpu


def _round_up(x, m):
    return ((x + m - 1) // m) * m


def _device_kind():
    try:
        return jax.devices()[0].device_kind.lower()
    except Exception:
        return ""


def _largest_divisor_leq(n, cap):
    g = max(1, min(n, cap))
    while n % g:
        g -= 1
    return g


def _plan(B, M, N, K):
    kind = _device_kind()
    is_v7 = ("v7" in kind) or ("7x" in kind)
    is_v5 = "v5" in kind
    use_int_mxu = not is_v7              # v7x has no int MXU -> bf16/f32 path

    max_mn = 512                         # >=512 -> above HBM ridge w/ resident A
    max_tk = 512 if is_v5 else 1024      # 1024 also caps bf16-path exactness

    # K tiling: nk tiles of tk (multiple of 128) that exactly cover padded K
    # (K blocks must never be ragged -- garbage in a reduction dim is fatal).
    k128 = _round_up(K, 128)
    nk = -(-k128 // max_tk)
    tk = _round_up(-(-k128 // nk), 128)
    Kp = nk * tk

    tm = M if M <= max_mn else max_mn
    tn = N if N <= max_mn else max_mn
    Mp = M if M <= max_mn else _round_up(M, tm)
    Np = N if N <= max_mn else _round_up(N, tn)

    # Batch packing (single-K-tile path only): pack G batches per grid step so
    # tiny per-batch matmuls amortize per-step overhead and keep the MXU fed.
    G = 1
    if nk == 1 and B > 1:
        per_batch_bytes = tm * Kp + tn * Kp + tm * tn        # int8 bytes/step
        g_vmem = max(1, (2 * 1024 * 1024) // max(per_batch_bytes, 1))
        g_rows = max(1, 512 // max(tm, 1))
        G = _largest_divisor_leq(B, min(g_rows, g_vmem))

    # Resident full-K A panel on the multi-K path (A read once per (b, i)
    # instead of once per N tile).  Cost: 2 * tm * Kp bytes of VMEM.
    resident_a = (nk > 1) and (2 * tm * Kp <= 12 * 1024 * 1024)

    vmem_limit = (48 if is_v7 else 64) * 1024 * 1024
    return dict(use_int_mxu=use_int_mxu, tm=tm, tn=tn, tk=tk, nk=nk,
                Mp=Mp, Np=Np, Kp=Kp, G=G, resident_a=resident_a,
                vmem_limit=vmem_limit)


# Contract K (axis 1 of both operands) -> (tm, tn); no transposed copy of b.
_DN = (((1,), (1,)), ((), ()))


def _int8_dot(a, b, use_int_mxu):
    """Exact product of int8 tiles a:(tm,tk) x b:(tn,tk)^T."""
    if use_int_mxu:
        # Native int8 MXU path (v5e / v6e): exact int32 accumulation, any K.
        return lax.dot_general(a, b, dimension_numbers=_DN,
                               preferred_element_type=jnp.int32)
    # v7x: bf16 is exact for int8 values; tk <= 1024 keeps per-tile partial
    # sums < 2^24 so the f32 MXU accumulation is exact.  Keep the int8 DMA and
    # cast in-kernel (casting in the wrapper would double HBM traffic).
    return lax.dot_general(a.astype(jnp.bfloat16), b.astype(jnp.bfloat16),
                           dimension_numbers=_DN,
                           preferred_element_type=jnp.float32)


def _make_single_k_kernel(G, use_int_mxu):
    """K fits in one tile: no accumulator, G packed batches per grid step."""
    def kernel(alpha_ref, a_ref, b_ref, o_ref):
        alpha = alpha_ref[0]
        for g in range(G):                       # static unroll over batches
            acc = _int8_dot(a_ref[g], b_ref[g], use_int_mxu).astype(jnp.float32)
            # round-half-to-even matches CUDA __float2int_rn
            q = jnp.clip(jnp.round(acc * alpha), -128.0, 127.0)
            o_ref[g] = q.astype(jnp.int8)
    return kernel


def _make_multi_k_kernel(tk, resident_a, use_int_mxu):
    """K spans multiple tiles: int32 VMEM accumulator, pl.when init/finalize."""
    def kernel(alpha_ref, a_ref, b_ref, o_ref, acc_ref):
        k = pl.program_id(3)

        @pl.when(k == 0)
        def _init():
            acc_ref[...] = jnp.zeros_like(acc_ref)

        if resident_a:
            off = pl.multiple_of(k * tk, tk)
            a = a_ref[0, :, pl.ds(off, tk)]      # slice K tile from resident panel
        else:
            a = a_ref[0]
        part = _int8_dot(a, b_ref[0], use_int_mxu)
        acc_ref[...] += part.astype(jnp.int32)   # no-op cast on the int MXU path

        @pl.when(k == pl.num_programs(3) - 1)
        def _finalize():
            alpha = alpha_ref[0]
            scaled = acc_ref[...].astype(jnp.float32) * alpha
            o_ref[0] = jnp.clip(jnp.round(scaled), -128.0, 127.0).astype(jnp.int8)
    return kernel


def bmm_s8t_s8n_s8t(a, b, alpha):
    """a: (B, M, K) int8, b: (B, N, K) int8, alpha scalar -> (B, M, N) int8."""
    B, M, K = a.shape
    Bb, N, Kb = b.shape
    assert B == Bb and K == Kb
    assert a.dtype == jnp.int8 and b.dtype == jnp.int8

    p = _plan(B, M, N, K)
    tm, tn, tk, nk = p["tm"], p["tn"], p["tk"], p["nk"]
    Mp, Np, Kp, G = p["Mp"], p["Np"], p["Kp"], p["G"]
    use_int_mxu, resident_a = p["use_int_mxu"], p["resident_a"]

    # Only K strictly needs zero padding (reduction dim); M/N are padded only
    # when large and ragged w.r.t. the 512 tile.
    # TODO(synk): use Pallas partial-block handling for ragged M/N to avoid
    # the extra HBM round trip of jnp.pad in that (rare) case.
    if Kp != K or Mp != M:
        a = jnp.pad(a, ((0, 0), (0, Mp - M), (0, Kp - K)))
    if Kp != K or Np != N:
        b = jnp.pad(b, ((0, 0), (0, Np - N), (0, Kp - K)))

    alpha_arr = jnp.asarray(alpha, dtype=jnp.float32).reshape((1,))

    if nk == 1:
        grid = (B // G, Mp // tm, Np // tn)
        out = pl.pallas_call(
            _make_single_k_kernel(G, use_int_mxu),
            out_shape=jax.ShapeDtypeStruct((B, Mp, Np), jnp.int8),
            grid=grid,
            in_specs=[
                pl.BlockSpec(memory_space=pltpu.SMEM),                       # alpha
                pl.BlockSpec((G, tm, Kp), lambda g, i, j: (g, i, 0)),        # a
                pl.BlockSpec((G, tn, Kp), lambda g, i, j: (g, j, 0)),        # b
            ],
            out_specs=pl.BlockSpec((G, tm, tn), lambda g, i, j: (g, i, j)),
            compiler_params=pltpu.CompilerParams(
                dimension_semantics=("parallel", "parallel", "parallel"),
                vmem_limit_bytes=p["vmem_limit"]),
        )(alpha_arr, a, b)
    else:
        grid = (B, Mp // tm, Np // tn, nk)
        if resident_a:
            a_spec = pl.BlockSpec((1, tm, Kp), lambda bi, i, j, k: (bi, i, 0))
        else:
            a_spec = pl.BlockSpec((1, tm, tk), lambda bi, i, j, k: (bi, i, k))
        out = pl.pallas_call(
            _make_multi_k_kernel(tk, resident_a, use_int_mxu),
            out_shape=jax.ShapeDtypeStruct((B, Mp, Np), jnp.int8),
            grid=grid,
            in_specs=[
                pl.BlockSpec(memory_space=pltpu.SMEM),                       # alpha
                a_spec,                                                      # a
                pl.BlockSpec((1, tn, tk), lambda bi, i, j, k: (bi, j, k)),   # b
            ],
            out_specs=pl.BlockSpec((1, tm, tn), lambda bi, i, j, k: (bi, i, j)),
            scratch_shapes=[pltpu.VMEM((tm, tn), jnp.int32)],
            compiler_params=pltpu.CompilerParams(
                dimension_semantics=("parallel", "parallel", "parallel",
                                     "arbitrary"),
                vmem_limit_bytes=p["vmem_limit"]),
        )(alpha_arr, a, b)

    if (Mp, Np) != (M, N):
        out = out[:, :M, :N]
    return out


class BMM_S8T_S8N_S8T:
    """JAX mirror of the PyTorch module (alpha is a registered buffer)."""

    def __init__(self, alpha):
        self.a = jnp.asarray(alpha, dtype=jnp.float32)

    def __call__(self, a, b):
        return bmm_s8t_s8n_s8t(a, b, self.a)

    @staticmethod
    def from_scale(a_scale, b_scale, output_scale):
        m = BMM_S8T_S8N_S8T(1.0)
        m.a = jnp.asarray(a_scale * b_scale / output_scale, dtype=jnp.float32)
        return m


def _reference(a, b, alpha):
    acc = jnp.einsum("bmk,bnk->bmn",
                     a.astype(jnp.int32), b.astype(jnp.int32)).astype(jnp.float32)
    return jnp.clip(jnp.round(acc * alpha), -128.0, 127.0).astype(jnp.int8)


if __name__ == "__main__":
    key = jax.random.PRNGKey(0)
    k1, k2, k3, k4 = jax.random.split(key, 4)

    # Small shapes consistent with the module's typical use (int8 attention
    # BMM): batch=2, seq=8, hidden=32.  Exercises the batch-packed single-K
    # fast path.
    B, M, N, K = 2, 8, 8, 32
    a = jax.random.randint(k1, (B, M, K), -128, 128, dtype=jnp.int32).astype(jnp.int8)
    b = jax.random.randint(k2, (B, N, K), -128, 128, dtype=jnp.int32).astype(jnp.int8)
    module = BMM_S8T_S8N_S8T.from_scale(0.05, 0.02, 0.5)
    out = jax.block_until_ready(module(a, b))
    ref = _reference(a, b, module.a)
    assert out.shape == (B, M, N) and out.dtype == jnp.int8
    assert jnp.array_equal(out, ref), "single-K-tile path mismatch"

    # Second small case exercising the multi-K-tile accumulator path
    # (resident A panel + int32 accumulation).
    B2, M2, N2, K2 = 1, 64, 64, 2304
    a2 = jax.random.randint(k3, (B2, M2, K2), -128, 128, dtype=jnp.int32).astype(jnp.int8)
    b2 = jax.random.randint(k4, (B2, N2, K2), -128, 128, dtype=jnp.int32).astype(jnp.int8)
    alpha2 = jnp.float32(1.5e-4)
    out2 = jax.block_until_ready(bmm_s8t_s8n_s8t(a2, b2, alpha2))
    ref2 = _reference(a2, b2, alpha2)
    assert jnp.array_equal(out2, ref2), "multi-K-tile path mismatch"

    print("KERNEL_OK")
</pallas_src>

<mosaic_0001>
module attributes {stable_mosaic.version = 11 : i64} {
  func.func @kernel(%arg0: i32, %arg1: i32, %arg2: i32, %arg3: memref<1xf32, #tpu.memory_space<smem>>, %arg4: memref<2x8x128xi8, #tpu.memory_space<vmem>>, %arg5: memref<2x8x128xi8, #tpu.memory_space<vmem>>, %arg6: memref<2x8x8xi8, #tpu.memory_space<vmem>>) attributes {dimension_semantics = [#tpu.dimension_semantics<parallel>, #tpu.dimension_semantics<parallel>, #tpu.dimension_semantics<parallel>], iteration_bounds = array<i64: 1, 1, 1>, scalar_prefetch = 0 : i64, scratch_operands = 0 : i64, tpu.core_type = #tpu.core_type<tc>, window_params = [{transform_indices = @transform_0, window_bounds = array<i64: 1>}, {transform_indices = @transform_1, window_bounds = array<i64: 2, 8, 128>}, {transform_indices = @transform_2, window_bounds = array<i64: 2, 8, 128>}, {transform_indices = @transform_3, window_bounds = array<i64: 2, 8, 8>}]} {
    %c0 = arith.constant 0 : index
    %0 = memref.load %arg3[%c0] : memref<1xf32, #tpu.memory_space<smem>>
    %c0_0 = arith.constant 0 : index
    %c0_1 = arith.constant 0 : index
    %c0_2 = arith.constant 0 : index
    %1 = vector.load %arg4[%c0_0, %c0_1, %c0_2] : memref<2x8x128xi8, #tpu.memory_space<vmem>>, vector<1x8x128xi8>
    %2 = vector.shape_cast %1 : vector<1x8x128xi8> to vector<8x128xi8>
    %c0_3 = arith.constant 0 : index
    %c0_4 = arith.constant 0 : index
    %c0_5 = arith.constant 0 : index
    %3 = vector.load %arg5[%c0_3, %c0_4, %c0_5] : memref<2x8x128xi8, #tpu.memory_space<vmem>>, vector<1x8x128xi8>
    %4 = vector.shape_cast %3 : vector<1x8x128xi8> to vector<8x128xi8>
    %cst = arith.constant dense<0> : vector<8x8xi32>
    %5 = tpu.matmul %2, %4, %cst {dimension_numbers = #tpu.dot_dimension_numbers<[1], [1], [0], [0], [0, 0, 1, 0], [], []>} : vector<8x128xi8>, vector<8x128xi8>, vector<8x8xi32> -> vector<8x8xi32>
    %6 = arith.sitofp %5 : vector<8x8xi32> to vector<8x8xf32>
    %7 = vector.broadcast %0 : f32 to vector<8x8xf32>
    %8 = arith.mulf %6, %7 : vector<8x8xf32>
    %9 = math.roundeven %8 : vector<8x8xf32>
    %cst_6 = arith.constant -1.280000e+02 : f32
    %cst_7 = arith.constant 1.270000e+02 : f32
    %10 = vector.broadcast %cst_6 : f32 to vector<8x8xf32>
    %11 = arith.maximumf %10, %9 : vector<8x8xf32>
    %12 = vector.broadcast %cst_7 : f32 to vector<8x8xf32>
    %13 = arith.minimumf %12, %11 : vector<8x8xf32>
    %14 = arith.fptosi %13 : vector<8x8xf32> to vector<8x8xi8>
    %c0_8 = arith.constant 0 : index
    %c0_9 = arith.constant 0 : index
    %c0_10 = arith.constant 0 : index
    %15 = vector.load %arg6[%c0_8, %c0_9, %c0_10] : memref<2x8x8xi8, #tpu.memory_space<vmem>>, vector<1x8x8xi8>
    %16 = vector.shape_cast %15 : vector<1x8x8xi8> to vector<8x8xi8>
    %17 = vector.shape_cast %14 : vector<8x8xi8> to vector<1x8x8xi8>
    tpu.vector_store %arg6[%c0_8, %c0_9, %c0_10], %17 {strides = array<i32>} : memref<2x8x8xi8, #tpu.memory_space<vmem>>, vector<1x8x8xi8>,
    %c1 = arith.constant 1 : index
    %c0_11 = arith.constant 0 : index
    %c0_12 = arith.constant 0 : index
    %18 = vector.load %arg4[%c1, %c0_11, %c0_12] : memref<2x8x128xi8, #tpu.memory_space<vmem>>, vector<1x8x128xi8>
    %19 = vector.shape_cast %18 : vector<1x8x128xi8> to vector<8x128xi8>
    %c1_13 = arith.constant 1 : index
    %c0_14 = arith.constant 0 : index
    %c0_15 = arith.constant 0 : index
    %20 = vector.load %arg5[%c1_13, %c0_14, %c0_15] : memref<2x8x128xi8, #tpu.memory_space<vmem>>, vector<1x8x128xi8>
    %21 = vector.shape_cast %20 : vector<1x8x128xi8> to vector<8x128xi8>
    %cst_16 = arith.constant dense<0> : vector<8x8xi32>
    %22 = tpu.matmul %19, %21, %cst_16 {dimension_numbers = #tpu.dot_dimension_numbers<[1], [1], [0], [0], [0, 0, 1, 0], [], []>} : vector<8x128xi8>, vector<8x128xi8>, vector<8x8xi32> -> vector<8x8xi32>
    %23 = arith.sitofp %22 : vector<8x8xi32> to vector<8x8xf32>
    %24 = vector.broadcast %0 : f32 to vector<8x8xf32>
    %25 = arith.mulf %23, %24 : vector<8x8xf32>
    %26 = math.roundeven %25 : vector<8x8xf32>
    %cst_17 = arith.constant -1.280000e+02 : f32
    %cst_18 = arith.constant 1.270000e+02 : f32
    %27 = vector.broadcast %cst_17 : f32 to vector<8x8xf32>
    %28 = arith.maximumf %27, %26 : vector<8x8xf32>
    %29 = vector.broadcast %cst_18 : f32 to vector<8x8xf32>
    %30 = arith.minimumf %29, %28 : vector<8x8xf32>
    %31 = arith.fptosi %30 : vector<8x8xf32> to vector<8x8xi8>
    %c1_19 = arith.constant 1 : index
    %c0_20 = arith.constant 0 : index
    %c0_21 = arith.constant 0 : index
    %32 = vector.load %arg6[%c1_19, %c0_20, %c0_21] : memref<2x8x8xi8, #tpu.memory_space<vmem>>, vector<1x8x8xi8>
    %33 = vector.shape_cast %32 : vector<1x8x8xi8> to vector<8x8xi8>
    %34 = vector.shape_cast %31 : vector<8x8xi8> to vector<1x8x8xi8>
    tpu.vector_store %arg6[%c1_19, %c0_20, %c0_21], %34 {strides = array<i32>} : memref<2x8x8xi8, #tpu.memory_space<vmem>>, vector<1x8x8xi8>,
    return
  }
  func.func @transform_0(%arg0: i32, %arg1: i32, %arg2: i32) -> i32 {
    %c0_i32 = arith.constant 0 : i32
    %c0_i32_0 = arith.constant 0 : i32
    return %c0_i32 : i32
  }
  func.func @transform_1(%arg0: i32, %arg1: i32, %arg2: i32) -> (i32, i32, i32) {
    %c0_i32 = arith.constant 0 : i32
    %c0_i32_0 = arith.constant 0 : i32
    return %arg0, %arg1, %c0_i32 : i32, i32, i32
  }
  func.func @transform_2(%arg0: i32, %arg1: i32, %arg2: i32) -> (i32, i32, i32) {
    %c0_i32 = arith.constant 0 : i32
    %c0_i32_0 = arith.constant 0 : i32
    return %arg0, %arg2, %c0_i32 : i32, i32, i32
  }
  func.func @transform_3(%arg0: i32, %arg1: i32, %arg2: i32) -> (i32, i32, i32) {
    %c0_i32 = arith.constant 0 : i32
    return %arg0, %arg1, %arg2 : i32, i32, i32
  }
}

</mosaic_0001>

<llo_original>
// kernel: tpu_custom_call.1
$region0: #{tpu_custom_call.1}
  #allocation0 [shape = 'u32[]', space=smem, size = 0x4, offset = 0x4, fixed_abs, tag = 'smem constant byte address 0x4 - core index']
  #allocation1 [shape = 'u32[144,128]{1,0:T(1,128)}', space=vmem, size = 0x12000, scoped, tag = 'internal scratch']
  #allocation2 [shape = 'f32[1]{0:T(128)S(6)}', space=smem, size = 0x200, scoped, tag = 'scoped memory for tpu_custom_call.1']
  %s0 = inlined_call_operand.<no memory space> [shape: f32[1], index: 0, kind: input, shape index: {}]
  %s1 = inlined_call_operand.hbm [shape: s8[2,8,128], index: 1, kind: input, shape index: {}]
  %s2 = inlined_call_operand.hbm [shape: s8[2,8,128], index: 2, kind: input, shape index: {}]
  %s3 = inlined_call_operand.hbm [shape: s8[2,8,8], index: 3, kind: output, shape index: {}]
  %s4 = sld [smem:[#allocation0]]
  $region30: #{tpu_custom_call.1} parent=0
    _
  %s6 = ssub.s32 1, %s4
  %s7 = scalar_select 0, %s6, %s4
  %8 = sst [smem:[#allocation2]] %s0
  $region1: #{tpu_custom_call.1} parent=0
    #allocation3 [shape = 'u8[2048]{0}', space=vmem, size = 0x800, scoped, tag = 'input window, operand 1, single buffered']
    #allocation4 [shape = 's32[1]{0}', space=sflag, size = 0x4, scoped, tag = 'scoped memory for tpu_custom_call.1']
    #allocation5 [shape = 's32[1]{0}', space=sflag, size = 0x4, scoped, tag = 'scoped memory for tpu_custom_call.1']
    #allocation6 [shape = 'u8[2048]{0}', space=vmem, size = 0x800, scoped, tag = 'input window, operand 2, single buffered']
    #allocation7 [shape = 's32[1]{0}', space=sflag, size = 0x4, scoped, tag = 'scoped memory for tpu_custom_call.1']
    #allocation8 [shape = 'u8[2048]{0}', space=vmem, size = 0x800, scoped, tag = 'output window, operand 0, single buffered']
    %9 = vsyncpa [#allocation4], 0
    %10 = vsyncpa [#allocation7], 0
    %11 = vsyncpa [#allocation5], 0
    // Predicated region
    $region2: #{tpu_custom_call.1} parent=1 // pred_check
      _
    $region3: #{tpu_custom_call.1} parent=1 // pred_check_branch
      %13 = sbr.rel (0) target = $region5
    $region4: #{tpu_custom_call.1} parent=1 // pred_region
      _
    $region5: #{tpu_custom_call.1} parent=1 // pred_fallthru
      _
    // Predicated region
    $region6: #{tpu_custom_call.1} parent=1 // pred_check
      _
    $region7: #{tpu_custom_call.1} parent=1 // pred_check_branch
      %15 = sbr.rel (0) target = $region9
    $region8: #{tpu_custom_call.1} parent=1 // pred_region
      %s17 = ssub.s32 64, 64
      %18 = vsyncadd [#allocation4], %s17
      %s19 = sshll.u32 [#allocation3], 4
      %s20 = int_to_ptr.vmem [resolvable:$true] %s19
      %25 = dma.hbm_to_vmem [thread:$0]  %s1, 64, %s20, [#allocation4], 32, 32, 2
    $region9: #{tpu_custom_call.1} parent=1 // pred_fallthru
      _
    // Predicated region
    $region10: #{tpu_custom_call.1} parent=1 // pred_check
      _
    $region11: #{tpu_custom_call.1} parent=1 // pred_check_branch
      %27 = sbr.rel (0) target = $region13
    $region12: #{tpu_custom_call.1} parent=1 // pred_region
      %s29 = ssub.s32 64, 64
      %30 = vsyncadd [#allocation7], %s29
      %s31 = sshll.u32 [#allocation6], 4
      %s32 = int_to_ptr.vmem [resolvable:$true] %s31
      %37 = dma.hbm_to_vmem [thread:$0]  %s2, 64, %s32, [#allocation7], 32, 32, 2
    $region13: #{tpu_custom_call.1} parent=1 // pred_fallthru
      _
    // Predicated region
    $region14: #{tpu_custom_call.1} parent=1 // pred_check
      _
    $region15: #{tpu_custom_call.1} parent=1 // pred_check_branch
      %39 = sbr.rel (0) target = $region17
    $region16: #{tpu_custom_call.1} parent=1 // pred_region
      %40 = dma.done [#allocation4], 64
    $region17: #{tpu_custom_call.1} parent=1 // pred_fallthru
      _
    // Predicated region
    $region18: #{tpu_custom_call.1} parent=1 // pred_check
      _
    $region19: #{tpu_custom_call.1} parent=1 // pred_check_branch
      %42 = sbr.rel (0) target = $region21
    $region20: #{tpu_custom_call.1} parent=1 // pred_region
      %43 = dma.done [#allocation7], 64
    $region21: #{tpu_custom_call.1} parent=1 // pred_fallthru
      _
    %s45 = sld [smem:[#allocation2]]
    %v46 = vld [vmem:[#allocation3] sm:$0x3]
    %v47 = vld [vmem:[#allocation6] sm:$0x3]
    %v48 = vunpack.c.l.s8.bf16 %v46
    %v49 = vunpack.c.l.s8.bf16 %v47
    %v50 = vcvt.s32.f32 0
    %51 = vmatprep.subr.bf16.mxu0 0
    %52 = vmatpush1.bf16.xpose.msra.mxu0 %v49
    %53 = vmatprep.subr.bf16.mxu0 0
    %54 = vmatpush1.bf16.xpose.msra.mxu0 0
    %55 = vmatprep.subr.bf16.mxu0 0
    %56 = vmatpush1.bf16.xpose.msra.mxu0 0
    %57 = vmatprep.subr.bf16.mxu0 0
    %58 = vmatpush1.bf16.xpose.msra.mxu0 0
    %59 = vmatprep.subr.bf16.mxu0 0
    %60 = vmatpush1.bf16.xpose.msra.mxu0 0
    %61 = vmatprep.subr.bf16.mxu0 0
    %62 = vmatpush1.bf16.xpose.msra.mxu0 0
    %63 = vmatprep.subr.bf16.mxu0 0
    %64 = vmatpush1.bf16.xpose.msra.mxu0 0
    %65 = vmatprep.subr.bf16.mxu0 0
    %66 = vmatpush1.bf16.xpose.msra.mxu0 0
    %67 = vmatprep.subr.bf16.mxu0 0
    %68 = vmatpush1.bf16.xpose.msra.mxu0 0
    %69 = vmatprep.subr.bf16.mxu0 0
    %70 = vmatpush1.bf16.xpose.msra.mxu0 0
    %71 = vmatprep.subr.bf16.mxu0 0
    %72 = vmatpush1.bf16.xpose.msra.mxu0 0
    %73 = vmatprep.subr.bf16.mxu0 0
    %74 = vmatpush1.bf16.xpose.msra.mxu0 0
    %75 = vmatprep.subr.bf16.mxu0 0
    %76 = vmatpush1.bf16.xpose.msra.mxu0 0
    %77 = vmatprep.subr.bf16.mxu0 0
    %78 = vmatpush1.bf16.xpose.msra.mxu0 0
    %79 = vmatprep.subr.bf16.mxu0 0
    %80 = vmatpush1.bf16.xpose.msra.mxu0 0
    %81 = vmatprep.subr.bf16.mxu0 0
    %82 = vmatpush1.bf16.xpose.msra.mxu0 0
    %83 = vmatprep.mubr.bf16.mxu0 0
    %84 = vmatmul.mubr.bf16.gmra.mrb[0].mxu0 %v48
    %v85 = vpop.f32.mrb[0].mxu0
    %v86 = vadd.f32 %v50, %v85
    %v87 = vpop.f32.mrb[0].mxu0
    %v88 = vpop.f32.mrb[0].mxu0
    %v89 = vpop.f32.mrb[0].mxu0
    %90 = vdwg.mxu0
    %v91 = vcvt.f32.s32.to.zero.pseudo %v86
    %v92 = vcvt.s32.f32 %v91
    %v93 = vstv %s45
    %v94 = vmul.f32 %v92, %v93
    %v95 = vround.ne.pseudo %v94
    %v96 = vmax.f32 %v95, -128.0
    %v97 = vmin.f32 %v96, 127.0
    %v98 = vtrunc.f32 %v97
    %v99 = vpack.c.f32.eXmY %v98, %v98, 312
    %v103 = vpack.c.b8 %v99, %v99
    %vm105 = vcmask 58368
    %106 = vst.msk [vmem:[#allocation8] sm:$0x3] %vm105, %v103
    %s107 = scalar_lea.vmem [#allocation3], 2
    %v108 = vld [vmem:[%s107] sm:$0x3]
    %s109 = scalar_lea.vmem [#allocation6], 2
    %v110 = vld [vmem:[%s109] sm:$0x3]
    %v111 = vunpack.c.l.s8.bf16 %v108
    %v112 = vunpack.c.l.s8.bf16 %v110
    %113 = vmatprep.subr.bf16.mxu0 0
    %114 = vmatpush1.bf16.xpose.msra.mxu0 %v112
    %115 = vmatprep.subr.bf16.mxu0 0
    %116 = vmatpush1.bf16.xpose.msra.mxu0 0
    %117 = vmatprep.subr.bf16.mxu0 0
    %118 = vmatpush1.bf16.xpose.msra.mxu0 0
    %119 = vmatprep.subr.bf16.mxu0 0
    %120 = vmatpush1.bf16.xpose.msra.mxu0 0
    %121 = vmatprep.subr.bf16.mxu0 0
    %122 = vmatpush1.bf16.xpose.msra.mxu0 0
    %123 = vmatprep.subr.bf16.mxu0 0
    %124 = vmatpush1.bf16.xpose.msra.mxu0 0
    %125 = vmatprep.subr.bf16.mxu0 0
    %126 = vmatpush1.bf16.xpose.msra.mxu0 0
    %127 = vmatprep.subr.bf16.mxu0 0
    %128 = vmatpush1.bf16.xpose.msra.mxu0 0
    %129 = vmatprep.subr.bf16.mxu0 0
    %130 = vmatpush1.bf16.xpose.msra.mxu0 0
    %131 = vmatprep.subr.bf16.mxu0 0
    %132 = vmatpush1.bf16.xpose.msra.mxu0 0
    %133 = vmatprep.subr.bf16.mxu0 0
    %134 = vmatpush1.bf16.xpose.msra.mxu0 0
    %135 = vmatprep.subr.bf16.mxu0 0
    %136 = vmatpush1.bf16.xpose.msra.mxu0 0
    %137 = vmatprep.subr.bf16.mxu0 0
    %138 = vmatpush1.bf16.xpose.msra.mxu0 0
    %139 = vmatprep.subr.bf16.mxu0 0
    %140 = vmatpush1.bf16.xpose.msra.mxu0 0
    %141 = vmatprep.subr.bf16.mxu0 0
    %142 = vmatpush1.bf16.xpose.msra.mxu0 0
    %143 = vmatprep.subr.bf16.mxu0 0
    %144 = vmatpush1.bf16.xpose.msra.mxu0 0
    %145 = vmatprep.mubr.bf16.mxu0 0
    %146 = vmatmul.mubr.bf16.gmra.mrb[0].mxu0 %v111
    %v147 = vpop.f32.mrb[0].mxu0
    %v148 = vadd.f32 %v50, %v147
    %v149 = vpop.f32.mrb[0].mxu0
    %v150 = vpop.f32.mrb[0].mxu0
    %v151 = vpop.f32.mrb[0].mxu0
    %152 = vdwg.mxu0
    %v153 = vcvt.f32.s32.to.zero.pseudo %v148
    %v154 = vcvt.s32.f32 %v153
    %v155 = vmul.f32 %v154, %v93
    %v156 = vround.ne.pseudo %v155
    %v157 = vmax.f32 %v156, -128.0
    %v158 = vmin.f32 %v157, 127.0
    %v159 = vtrunc.f32 %v158
    %v160 = vpack.c.f32.eXmY %v159, %v159, 312
    %v164 = vpack.c.b8 %v160, %v160
    %s166 = scalar_lea.vmem [#allocation8], 2
    %167 = vst.msk [vmem:[%s166] sm:$0x3] %vm105, %v164
    // Predicated region
    $region22: #{tpu_custom_call.1} parent=1 // pred_check
      _
    $region23: #{tpu_custom_call.1} parent=1 // pred_check_branch
      %169 = sbr.rel (0) target = $region25
    $region24: #{tpu_custom_call.1} parent=1 // pred_region
      %s171 = ssub.s32 64, 64
      %172 = vsyncadd [#allocation5], %s171
      %s173 = sshll.u32 [#allocation8], 4
      %s174 = int_to_ptr.vmem [resolvable:$true] %s173
      %179 = dma.vmem_to_hbm [thread:$0]  %s174, 64, %s3, [#allocation5], 32, 32, 2
    $region25: #{tpu_custom_call.1} parent=1 // pred_fallthru
      _
    // Predicated region
    $region26: #{tpu_custom_call.1} parent=1 // pred_check
      _
    $region27: #{tpu_custom_call.1} parent=1 // pred_check_branch
      %181 = sbr.rel (0) target = $region29
    $region28: #{tpu_custom_call.1} parent=1 // pred_region
      %182 = dma.done [#allocation5], 64
    $region29: #{tpu_custom_call.1} parent=1 // pred_fallthru
      _
    %183 = vsyncpa [#allocation4], 1
    %184 = vsyncpa [#allocation7], 1
    %185 = vsyncpa [#allocation5], 1

</llo_original>
